<compile_context>
chip_gen: v6e
topology: v6e:2x2x1
jax: 0.10.0
libtpu: 0.0.40
codegen_flags: <defaults>
</compile_context>

<pallas_src>
import functools

import jax
import jax.numpy as jnp
from jax.experimental import pallas as pl
from jax.experimental.pallas import tpu as pltpu


def _round_up(x, m):
    return (x + m - 1) // m * m


def macl_agent_kernel(
    x_ref, h_ref,
    wfc_ref, bfc_ref,
    wih_ref, whh_ref,
    bi_ref, bhn_ref,
    wfc2_ref, bfc2_ref,
    q_ref, hout_ref,
    *, Hp,
):
    x = x_ref[...]            # (TB, Dp)
    h_in = h_ref[...]         # (TB, Hp)

    # ---- Encoder.fc + ReLU ----
    xe = jnp.maximum(
        jnp.dot(x, wfc_ref[...], preferred_element_type=jnp.float32) + bfc_ref[...],
        0.0,
    )                          # (TB, Hp)

    # ---- GRUCell: two fused gate matmuls (TB,Hp)@(Hp,3Hp) ----
    # bi_ref packs [b_ir+b_hr | b_iz+b_hz | b_in]; b_hn is kept separate because it
    # must be scaled by r inside the n-gate.
    gi = jnp.dot(xe, wih_ref[...], preferred_element_type=jnp.float32) + bi_ref[...]
    gh = jnp.dot(h_in, whh_ref[...], preferred_element_type=jnp.float32)

    rz = jax.nn.sigmoid(gi[:, : 2 * Hp] + gh[:, : 2 * Hp])   # one wide EUP sigmoid
    r = rz[:, :Hp]
    z = rz[:, Hp:]
    n = jnp.tanh(gi[:, 2 * Hp:] + r * (gh[:, 2 * Hp:] + bhn_ref[...]))
    h_new = n + z * (h_in - n)                                # == (1-z)*n + z*h_in

    # ---- fc2 ----
    q = jnp.dot(h_new, wfc2_ref[...], preferred_element_type=jnp.float32) + bfc2_ref[...]

    q_ref[...] = q.astype(q_ref.dtype)
    hout_ref[...] = h_new.astype(hout_ref.dtype)


def pack_params(p, D_in, H, A):
    """Pad to lane multiples and fuse the per-gate weights/biases for the kernel."""
    Dp, Hp, Ap = _round_up(D_in, 128), _round_up(H, 128), _round_up(A, 128)

    def pad2(a, rows, cols):
        return jnp.pad(a, ((0, rows - a.shape[0]), (0, cols - a.shape[1])))

    w_fc = pad2(p["w_fc"], Dp, Hp)
    b_fc = pad2(p["b_fc"], 1, Hp)

    w_ih = jnp.concatenate(
        [pad2(p["w_ir"], Hp, Hp), pad2(p["w_iz"], Hp, Hp), pad2(p["w_in"], Hp, Hp)], axis=1)
    w_hh = jnp.concatenate(
        [pad2(p["w_hr"], Hp, Hp), pad2(p["w_hz"], Hp, Hp), pad2(p["w_hn"], Hp, Hp)], axis=1)

    b_i = jnp.concatenate(
        [pad2(p["b_ir"] + p["b_hr"], 1, Hp),
         pad2(p["b_iz"] + p["b_hz"], 1, Hp),
         pad2(p["b_in"], 1, Hp)], axis=1)
    b_hn = pad2(p["b_hn"], 1, Hp)

    w_fc2 = pad2(p["w_fc2"], Hp, Ap)
    b_fc2 = pad2(p["b_fc2"], 1, Ap)

    return {
        "w_fc": w_fc, "b_fc": b_fc,
        "w_ih": w_ih, "w_hh": w_hh,
        "b_i": b_i, "b_hn": b_hn,
        "w_fc2": w_fc2, "b_fc2": b_fc2,
    }, (Dp, Hp, Ap)


def macl_agent_forward(inputs, hidden_states, params, *, block_b=256):
    """
    inputs:        (bs * n_agents, input_shape) float32
    hidden_states: (bs, n_agents, rnn_hidden_dim) float32
    returns: (q (B, n_actions), h (B, rnn_hidden_dim))
    """
    B, D_in = inputs.shape
    H = params["w_fc"].shape[1]
    A = params["w_fc2"].shape[1]

    kp, (Dp, Hp, Ap) = pack_params(params, D_in, H, A)

    TB = min(block_b, _round_up(B, 8))       # batch tile (sublane-aligned)
    Bp = _round_up(B, TB)

    x_pad = jnp.pad(inputs, ((0, Bp - B), (0, Dp - D_in)))
    h_in = hidden_states.reshape(-1, H)      # glue reshape (plain JAX)
    h_pad = jnp.pad(h_in, ((0, Bp - B), (0, Hp - H)))

    grid = (Bp // TB,)

    def act_spec(cols):
        return pl.BlockSpec((TB, cols), lambda i: (i, 0))

    def res_spec(rows, cols):                # weights/biases stay VMEM-resident
        return pl.BlockSpec((rows, cols), lambda i: (0, 0))

    q_pad, h_out_pad = pl.pallas_call(
        functools.partial(macl_agent_kernel, Hp=Hp),
        out_shape=(
            jax.ShapeDtypeStruct((Bp, Ap), jnp.float32),
            jax.ShapeDtypeStruct((Bp, Hp), jnp.float32),
        ),
        grid=grid,
        in_specs=[
            act_spec(Dp),            # x
            act_spec(Hp),            # h_in
            res_spec(Dp, Hp),        # w_fc
            res_spec(1, Hp),         # b_fc
            res_spec(Hp, 3 * Hp),    # w_ih (r|z|n)
            res_spec(Hp, 3 * Hp),    # w_hh (r|z|n)
            res_spec(1, 3 * Hp),     # b_i  (folded r,z biases + b_in)
            res_spec(1, Hp),         # b_hn
            res_spec(Hp, Ap),        # w_fc2
            res_spec(1, Ap),         # b_fc2
        ],
        out_specs=(act_spec(Ap), act_spec(Hp)),
        compiler_params=pltpu.CompilerParams(
            dimension_semantics=("parallel",),
        ),
    )(
        x_pad, h_pad,
        kp["w_fc"], kp["b_fc"],
        kp["w_ih"], kp["w_hh"],
        kp["b_i"], kp["b_hn"],
        kp["w_fc2"], kp["b_fc2"],
    )

    return q_pad[:B, :A], h_out_pad[:B, :H]


def init_params(key, input_shape, rnn_hidden_dim, n_actions):
    """Deterministic synthetic parameters (PyTorch-equivalent shapes, pre-transposed)."""
    ks = jax.random.split(key, 12)
    H = rnn_hidden_dim

    def w(k, shape, scale):
        return jax.random.uniform(k, shape, jnp.float32, -1.0, 1.0) * scale

    s_fc = 1.0 / jnp.sqrt(input_shape)
    s_h = 1.0 / jnp.sqrt(H)

    # nn.Linear(input_shape, H): weight (H, D_in) -> stored transposed (D_in, H)
    w_fc = w(ks[0], (input_shape, H), s_fc)
    b_fc = w(ks[1], (1, H), s_fc)

    # nn.GRUCell(H, H): weight_ih (3H, H), weight_hh (3H, H), order r, z, n.
    # Stored per-gate, transposed to (H, H).
    w_ir, w_iz, w_in = (w(ks[2], (H, H), s_h), w(ks[3], (H, H), s_h), w(ks[4], (H, H), s_h))
    w_hr, w_hz, w_hn = (w(ks[5], (H, H), s_h), w(ks[6], (H, H), s_h), w(ks[7], (H, H), s_h))
    b_ih = w(ks[8], (3, H), s_h)
    b_hh = w(ks[9], (3, H), s_h)

    # nn.Linear(H, n_actions): weight (A, H) -> stored transposed (H, A)
    w_fc2 = w(ks[10], (H, n_actions), s_h)
    b_fc2 = w(ks[11], (1, n_actions), s_h)

    return {
        "w_fc": w_fc, "b_fc": b_fc,
        "w_ir": w_ir, "w_iz": w_iz, "w_in": w_in,
        "b_ir": b_ih[0:1], "b_iz": b_ih[1:2], "b_in": b_ih[2:3],
        "w_hr": w_hr, "w_hz": w_hz, "w_hn": w_hn,
        "b_hr": b_hh[0:1], "b_hz": b_hh[1:2], "b_hn": b_hh[2:3],
        "w_fc2": w_fc2, "b_fc2": b_fc2,
    }


def reference_forward(inputs, hidden_states, p):
    """Pure-JAX reference matching PyTorch semantics exactly."""
    H = p["w_fc"].shape[1]
    x = jnp.maximum(inputs @ p["w_fc"] + p["b_fc"], 0.0)
    h_in = hidden_states.reshape(-1, H)
    r = jax.nn.sigmoid(x @ p["w_ir"] + p["b_ir"] + h_in @ p["w_hr"] + p["b_hr"])
    z = jax.nn.sigmoid(x @ p["w_iz"] + p["b_iz"] + h_in @ p["w_hz"] + p["b_hz"])
    n = jnp.tanh(x @ p["w_in"] + p["b_in"] + r * (h_in @ p["w_hn"] + p["b_hn"]))
    h = (1.0 - z) * n + z * h_in
    q = h @ p["w_fc2"] + p["b_fc2"]
    return q, h


if __name__ == "__main__":
    bs, n_agents = 2, 4
    input_shape = 16
    rnn_hidden_dim = 32
    n_actions = 8

    key = jax.random.PRNGKey(0)
    k_in, k_h, k_p = jax.random.split(key, 3)

    inputs = jax.random.normal(k_in, (bs * n_agents, input_shape), jnp.float32)
    hidden_states = jax.random.normal(k_h, (bs, n_agents, rnn_hidden_dim), jnp.float32)
    params = init_params(k_p, input_shape, rnn_hidden_dim, n_actions)

    q, h = macl_agent_forward(inputs, hidden_states, params)
    jax.block_until_ready((q, h))

    q_ref, h_ref = reference_forward(inputs, hidden_states, params)
    assert q.shape == (bs * n_agents, n_actions)
    assert h.shape == (bs * n_agents, rnn_hidden_dim)
    assert jnp.allclose(q, q_ref, atol=1e-5, rtol=1e-5)
    assert jnp.allclose(h, h_ref, atol=1e-5, rtol=1e-5)

    print("KERNEL_OK")
</pallas_src>

<mosaic_0001>
module attributes {stable_mosaic.version = 11 : i64} {
  func.func @macl_agent_kernel(%arg0: i32, %arg1: memref<8x128xf32, #tpu.memory_space<vmem>>, %arg2: memref<8x128xf32, #tpu.memory_space<vmem>>, %arg3: memref<128x128xf32, #tpu.memory_space<vmem>>, %arg4: memref<1x128xf32, #tpu.memory_space<vmem>>, %arg5: memref<128x384xf32, #tpu.memory_space<vmem>>, %arg6: memref<128x384xf32, #tpu.memory_space<vmem>>, %arg7: memref<1x384xf32, #tpu.memory_space<vmem>>, %arg8: memref<1x128xf32, #tpu.memory_space<vmem>>, %arg9: memref<128x128xf32, #tpu.memory_space<vmem>>, %arg10: memref<1x128xf32, #tpu.memory_space<vmem>>, %arg11: memref<8x128xf32, #tpu.memory_space<vmem>>, %arg12: memref<8x128xf32, #tpu.memory_space<vmem>>) attributes {dimension_semantics = [#tpu.dimension_semantics<parallel>], iteration_bounds = array<i64: 1>, scalar_prefetch = 0 : i64, scratch_operands = 0 : i64, tpu.core_type = #tpu.core_type<tc>, window_params = [{transform_indices = @transform_0, window_bounds = array<i64: 8, 128>}, {transform_indices = @transform_1, window_bounds = array<i64: 8, 128>}, {pipeline_mode = #tpu.pipeline_mode<synchronous>, transform_indices = @transform_2, window_bounds = array<i64: 128, 128>}, {pipeline_mode = #tpu.pipeline_mode<synchronous>, transform_indices = @transform_3, window_bounds = array<i64: 1, 128>}, {pipeline_mode = #tpu.pipeline_mode<synchronous>, transform_indices = @transform_4, window_bounds = array<i64: 128, 384>}, {pipeline_mode = #tpu.pipeline_mode<synchronous>, transform_indices = @transform_5, window_bounds = array<i64: 128, 384>}, {pipeline_mode = #tpu.pipeline_mode<synchronous>, transform_indices = @transform_6, window_bounds = array<i64: 1, 384>}, {pipeline_mode = #tpu.pipeline_mode<synchronous>, transform_indices = @transform_7, window_bounds = array<i64: 1, 128>}, {pipeline_mode = #tpu.pipeline_mode<synchronous>, transform_indices = @transform_8, window_bounds = array<i64: 128, 128>}, {pipeline_mode = #tpu.pipeline_mode<synchronous>, transform_indices = @transform_9, window_bounds = array<i64: 1, 128>}, {transform_indices = @transform_10, window_bounds = array<i64: 8, 128>}, {transform_indices = @transform_11, window_bounds = array<i64: 8, 128>}]} {
    %c0 = arith.constant 0 : index
    %c0_0 = arith.constant 0 : index
    %0 = vector.load %arg1[%c0, %c0_0] : memref<8x128xf32, #tpu.memory_space<vmem>>, vector<8x128xf32>
    %c0_1 = arith.constant 0 : index
    %c0_2 = arith.constant 0 : index
    %1 = vector.load %arg2[%c0_1, %c0_2] : memref<8x128xf32, #tpu.memory_space<vmem>>, vector<8x128xf32>
    %c0_3 = arith.constant 0 : index
    %c0_4 = arith.constant 0 : index
    %2 = vector.load %arg3[%c0_3, %c0_4] : memref<128x128xf32, #tpu.memory_space<vmem>>, vector<128x128xf32>
    %cst = arith.constant dense<0.000000e+00> : vector<8x128xf32>
    %3 = tpu.matmul %0, %2, %cst {dimension_numbers = #tpu.dot_dimension_numbers<[1], [0], [0], [1], [0, 0, 1, 1], [], []>} : vector<8x128xf32>, vector<128x128xf32>, vector<8x128xf32> -> vector<8x128xf32>
    %c0_5 = arith.constant 0 : index
    %c0_6 = arith.constant 0 : index
    %4 = vector.load %arg4[%c0_5, %c0_6] : memref<1x128xf32, #tpu.memory_space<vmem>>, vector<1x128xf32>
    %5 = vector.broadcast %4 : vector<1x128xf32> to vector<8x128xf32>
    %6 = arith.addf %3, %5 : vector<8x128xf32>
    %cst_7 = arith.constant 0.000000e+00 : f32
    %7 = vector.broadcast %cst_7 : f32 to vector<8x128xf32>
    %8 = arith.maximumf %6, %7 : vector<8x128xf32>
    %c0_8 = arith.constant 0 : index
    %c0_9 = arith.constant 0 : index
    %9 = vector.load %arg5[%c0_8, %c0_9] : memref<128x384xf32, #tpu.memory_space<vmem>>, vector<128x384xf32>
    %cst_10 = arith.constant dense<0.000000e+00> : vector<8x384xf32>
    %10 = tpu.matmul %8, %9, %cst_10 {dimension_numbers = #tpu.dot_dimension_numbers<[1], [0], [0], [1], [0, 0, 1, 1], [], []>} : vector<8x128xf32>, vector<128x384xf32>, vector<8x384xf32> -> vector<8x384xf32>
    %c0_11 = arith.constant 0 : index
    %c0_12 = arith.constant 0 : index
    %11 = vector.load %arg7[%c0_11, %c0_12] : memref<1x384xf32, #tpu.memory_space<vmem>>, vector<1x384xf32>
    %12 = vector.broadcast %11 : vector<1x384xf32> to vector<8x384xf32>
    %13 = arith.addf %10, %12 : vector<8x384xf32>
    %c0_13 = arith.constant 0 : index
    %c0_14 = arith.constant 0 : index
    %14 = vector.load %arg6[%c0_13, %c0_14] : memref<128x384xf32, #tpu.memory_space<vmem>>, vector<128x384xf32>
    %cst_15 = arith.constant dense<0.000000e+00> : vector<8x384xf32>
    %15 = tpu.matmul %1, %14, %cst_15 {dimension_numbers = #tpu.dot_dimension_numbers<[1], [0], [0], [1], [0, 0, 1, 1], [], []>} : vector<8x128xf32>, vector<128x384xf32>, vector<8x384xf32> -> vector<8x384xf32>
    %16 = vector.extract_strided_slice %13 {offsets = [0, 0], sizes = [8, 256], strides = [1, 1]} : vector<8x384xf32> to vector<8x256xf32>
    %17 = vector.extract_strided_slice %15 {offsets = [0, 0], sizes = [8, 256], strides = [1, 1]} : vector<8x384xf32> to vector<8x256xf32>
    %18 = arith.addf %16, %17 : vector<8x256xf32>
    %19 = arith.negf %18 : vector<8x256xf32>
    %20 = math.exp %19 : vector<8x256xf32>
    %cst_16 = arith.constant 1.000000e+00 : f32
    %21 = vector.broadcast %cst_16 : f32 to vector<8x256xf32>
    %22 = arith.addf %21, %20 : vector<8x256xf32>
    %23 = arith.divf %21, %22 : vector<8x256xf32>
    %24 = vector.extract_strided_slice %23 {offsets = [0, 0], sizes = [8, 128], strides = [1, 1]} : vector<8x256xf32> to vector<8x128xf32>
    %25 = vector.extract_strided_slice %23 {offsets = [0, 128], sizes = [8, 128], strides = [1, 1]} : vector<8x256xf32> to vector<8x128xf32>
    %26 = vector.extract_strided_slice %13 {offsets = [0, 256], sizes = [8, 128], strides = [1, 1]} : vector<8x384xf32> to vector<8x128xf32>
    %27 = vector.extract_strided_slice %15 {offsets = [0, 256], sizes = [8, 128], strides = [1, 1]} : vector<8x384xf32> to vector<8x128xf32>
    %c0_17 = arith.constant 0 : index
    %c0_18 = arith.constant 0 : index
    %28 = vector.load %arg8[%c0_17, %c0_18] : memref<1x128xf32, #tpu.memory_space<vmem>>, vector<1x128xf32>
    %29 = vector.broadcast %28 : vector<1x128xf32> to vector<8x128xf32>
    %30 = arith.addf %27, %29 : vector<8x128xf32>
    %31 = arith.mulf %24, %30 : vector<8x128xf32>
    %32 = arith.addf %26, %31 : vector<8x128xf32>
    %33 = math.tanh %32 : vector<8x128xf32>
    %34 = arith.subf %1, %33 : vector<8x128xf32>
    %35 = arith.mulf %25, %34 : vector<8x128xf32>
    %36 = arith.addf %33, %35 : vector<8x128xf32>
    %c0_19 = arith.constant 0 : index
    %c0_20 = arith.constant 0 : index
    %37 = vector.load %arg9[%c0_19, %c0_20] : memref<128x128xf32, #tpu.memory_space<vmem>>, vector<128x128xf32>
    %cst_21 = arith.constant dense<0.000000e+00> : vector<8x128xf32>
    %38 = tpu.matmul %36, %37, %cst_21 {dimension_numbers = #tpu.dot_dimension_numbers<[1], [0], [0], [1], [0, 0, 1, 1], [], []>} : vector<8x128xf32>, vector<128x128xf32>, vector<8x128xf32> -> vector<8x128xf32>
    %c0_22 = arith.constant 0 : index
    %c0_23 = arith.constant 0 : index
    %39 = vector.load %arg10[%c0_22, %c0_23] : memref<1x128xf32, #tpu.memory_space<vmem>>, vector<1x128xf32>
    %40 = vector.broadcast %39 : vector<1x128xf32> to vector<8x128xf32>
    %41 = arith.addf %38, %40 : vector<8x128xf32>
    %c0_24 = arith.constant 0 : index
    %c0_25 = arith.constant 0 : index
    %42 = vector.load %arg11[%c0_24, %c0_25] : memref<8x128xf32, #tpu.memory_space<vmem>>, vector<8x128xf32>
    tpu.vector_store %arg11[%c0_24, %c0_25], %41 {strides = array<i32>} : memref<8x128xf32, #tpu.memory_space<vmem>>, vector<8x128xf32>,
    %c0_26 = arith.constant 0 : index
    %c0_27 = arith.constant 0 : index
    %43 = vector.load %arg12[%c0_26, %c0_27] : memref<8x128xf32, #tpu.memory_space<vmem>>, vector<8x128xf32>
    tpu.vector_store %arg12[%c0_26, %c0_27], %36 {strides = array<i32>} : memref<8x128xf32, #tpu.memory_space<vmem>>, vector<8x128xf32>,
    return
  }
  func.func @transform_0(%arg0: i32) -> (i32, i32) {
    %c0_i32 = arith.constant 0 : i32
    %c0_i32_0 = arith.constant 0 : i32
    return %arg0, %c0_i32 : i32, i32
  }
  func.func @transform_1(%arg0: i32) -> (i32, i32) {
    %c0_i32 = arith.constant 0 : i32
    %c0_i32_0 = arith.constant 0 : i32
    return %arg0, %c0_i32 : i32, i32
  }
  func.func @transform_2(%arg0: i32) -> (i32, i32) {
    %c0_i32 = arith.constant 0 : i32
    %c0_i32_0 = arith.constant 0 : i32
    %c0_i32_1 = arith.constant 0 : i32
    return %c0_i32, %c0_i32_0 : i32, i32
  }
  func.func @transform_3(%arg0: i32) -> (i32, i32) {
    %c0_i32 = arith.constant 0 : i32
    %c0_i32_0 = arith.constant 0 : i32
    %c0_i32_1 = arith.constant 0 : i32
    return %c0_i32, %c0_i32_0 : i32, i32
  }
  func.func @transform_4(%arg0: i32) -> (i32, i32) {
    %c0_i32 = arith.constant 0 : i32
    %c0_i32_0 = arith.constant 0 : i32
    %c0_i32_1 = arith.constant 0 : i32
    return %c0_i32, %c0_i32_0 : i32, i32
  }
  func.func @transform_5(%arg0: i32) -> (i32, i32) {
    %c0_i32 = arith.constant 0 : i32
    %c0_i32_0 = arith.constant 0 : i32
    %c0_i32_1 = arith.constant 0 : i32
    return %c0_i32, %c0_i32_0 : i32, i32
  }
  func.func @transform_6(%arg0: i32) -> (i32, i32) {
    %c0_i32 = arith.constant 0 : i32
    %c0_i32_0 = arith.constant 0 : i32
    %c0_i32_1 = arith.constant 0 : i32
    return %c0_i32, %c0_i32_0 : i32, i32
  }
  func.func @transform_7(%arg0: i32) -> (i32, i32) {
    %c0_i32 = arith.constant 0 : i32
    %c0_i32_0 = arith.constant 0 : i32
    %c0_i32_1 = arith.constant 0 : i32
    return %c0_i32, %c0_i32_0 : i32, i32
  }
  func.func @transform_8(%arg0: i32) -> (i32, i32) {
    %c0_i32 = arith.constant 0 : i32
    %c0_i32_0 = arith.constant 0 : i32
    %c0_i32_1 = arith.constant 0 : i32
    return %c0_i32, %c0_i32_0 : i32, i32
  }
  func.func @transform_9(%arg0: i32) -> (i32, i32) {
    %c0_i32 = arith.constant 0 : i32
    %c0_i32_0 = arith.constant 0 : i32
    %c0_i32_1 = arith.constant 0 : i32
    return %c0_i32, %c0_i32_0 : i32, i32
  }
  func.func @transform_10(%arg0: i32) -> (i32, i32) {
    %c0_i32 = arith.constant 0 : i32
    %c0_i32_0 = arith.constant 0 : i32
    return %arg0, %c0_i32 : i32, i32
  }
  func.func @transform_11(%arg0: i32) -> (i32, i32) {
    %c0_i32 = arith.constant 0 : i32
    %c0_i32_0 = arith.constant 0 : i32
    return %arg0, %c0_i32 : i32, i32
  }
}

</mosaic_0001>

<llo_original>
// kernel: tpu_custom_call.1
$region0: #{tpu_custom_call.1}
  #allocation0 [shape = 'u32[]', space=smem, size = 0x4, offset = 0x4, fixed_abs, tag = 'smem constant byte address 0x4 - core index']
  #allocation1 [shape = 'u32[144,128]{1,0:T(1,128)}', space=vmem, size = 0x12000, scoped, tag = 'internal scratch']
  %s0 = inlined_call_operand.hbm [shape: f32[8,128], index: 0, kind: input, shape index: {}]
  %s1 = inlined_call_operand.hbm [shape: f32[8,128], index: 1, kind: input, shape index: {}]
  %s2 = inlined_call_operand.hbm [shape: f32[128,128], index: 2, kind: input, shape index: {}]
  %s3 = inlined_call_operand.vmem [shape: f32[1,128], index: 3, kind: input, shape index: {}]
  %s4 = inlined_call_operand.hbm [shape: f32[128,384], index: 4, kind: input, shape index: {}]
  %s5 = inlined_call_operand.hbm [shape: f32[128,384], index: 5, kind: input, shape index: {}]
  %s6 = inlined_call_operand.vmem [shape: f32[1,384], index: 6, kind: input, shape index: {}]
  %s7 = inlined_call_operand.vmem [shape: f32[1,128], index: 7, kind: input, shape index: {}]
  %s8 = inlined_call_operand.hbm [shape: f32[128,128], index: 8, kind: input, shape index: {}]
  %s9 = inlined_call_operand.vmem [shape: f32[1,128], index: 9, kind: input, shape index: {}]
  %s10 = inlined_call_operand.hbm [shape: f32[8,128], index: 10, kind: output, shape index: {0}]
  %s11 = inlined_call_operand.hbm [shape: f32[8,128], index: 11, kind: output, shape index: {1}]
  %12 = xla_tuple %s10, %s11
  %s13 = sld [smem:[#allocation0]]
  $region82: #{tpu_custom_call.1} parent=0
    _
  %s15 = ssub.s32 1, %s13
  %s16 = scalar_select 0, %s15, %s13
  $region1: #{tpu_custom_call.1} parent=0
    #allocation2 [shape = 'u8[4096]{0}', space=vmem, size = 0x1000, scoped, tag = 'input window, operand 0, single buffered']
    #allocation3 [shape = 's32[1]{0}', space=sflag, size = 0x4, scoped, tag = 'scoped memory for tpu_custom_call.1']
    #allocation4 [shape = 's32[1]{0}', space=sflag, size = 0x4, scoped, tag = 'scoped memory for tpu_custom_call.1']
    #allocation5 [shape = 'u8[4096]{0}', space=vmem, size = 0x1000, scoped, tag = 'input window, operand 1, single buffered']
    #allocation6 [shape = 's32[1]{0}', space=sflag, size = 0x4, scoped, tag = 'scoped memory for tpu_custom_call.1']
    #allocation7 [shape = 'u8[65536]{0}', space=vmem, size = 0x10000, scoped, tag = 'input window, operand 2, single buffered']
    #allocation8 [shape = 'u8[196608]{0}', space=vmem, size = 0x30000, scoped, tag = 'input window, operand 4, single buffered']
    #allocation9 [shape = 's32[1]{0}', space=sflag, size = 0x4, scoped, tag = 'scoped memory for tpu_custom_call.1']
    #allocation10 [shape = 'u8[196608]{0}', space=vmem, size = 0x30000, scoped, tag = 'input window, operand 5, single buffered']
    #allocation11 [shape = 'u8[65536]{0}', space=vmem, size = 0x10000, scoped, tag = 'input window, operand 8, single buffered']
    #allocation12 [shape = 's32[1]{0}', space=sflag, size = 0x4, scoped, tag = 'scoped memory for tpu_custom_call.1']
    #allocation13 [shape = 'u8[4096]{0}', space=vmem, size = 0x1000, scoped, tag = 'output window, operand 0, single buffered']
    #allocation14 [shape = 'u8[4096]{0}', space=vmem, size = 0x1000, scoped, tag = 'output window, operand 1, single buffered']
    #allocation15 [shape = 's32[1]{0}', space=sflag, size = 0x4, scoped, tag = 'scoped memory for tpu_custom_call.1']
    %17 = vsyncpa [#allocation3], 0
    %18 = vsyncpa [#allocation6], 0
    %19 = vsyncpa [#allocation9], 0
    %20 = vsyncpa [#allocation12], 0
    %21 = vsyncpa [#allocation4], 0
    %22 = vsyncpa [#allocation15], 0
    // Predicated region
    $region2: #{tpu_custom_call.1} parent=1 // pred_check
      _
    $region3: #{tpu_custom_call.1} parent=1 // pred_check_branch
      %24 = sbr.rel (0) target = $region5
    $region4: #{tpu_custom_call.1} parent=1 // pred_region
      %s26 = ssub.s32 128, 128
      %27 = vsyncadd [#allocation3], %s26
      %s29 = sshll.u32 [#allocation2], 4
      %s30 = int_to_ptr.vmem [resolvable:$true] %s29
      %32 = dma.hbm_to_vmem [thread:$0]  %s0, 128, %s30, [#allocation3]
    $region5: #{tpu_custom_call.1} parent=1 // pred_fallthru
      _
    // Predicated region
    $region6: #{tpu_custom_call.1} parent=1 // pred_check
      _
    $region7: #{tpu_custom_call.1} parent=1 // pred_check_branch
      %34 = sbr.rel (0) target = $region9
    $region8: #{tpu_custom_call.1} parent=1 // pred_region
      %s36 = ssub.s32 128, 128
      %37 = vsyncadd [#allocation6], %s36
      %s39 = sshll.u32 [#allocation5], 4
      %s40 = int_to_ptr.vmem [resolvable:$true] %s39
      %42 = dma.hbm_to_vmem [thread:$0]  %s1, 128, %s40, [#allocation6]
    $region9: #{tpu_custom_call.1} parent=1 // pred_fallthru
      _
    // Predicated region
    $region10: #{tpu_custom_call.1} parent=1 // pred_check
      _
    $region11: #{tpu_custom_call.1} parent=1 // pred_check_branch
      %44 = sbr.rel (0) target = $region13
    $region12: #{tpu_custom_call.1} parent=1 // pred_region
      %s46 = ssub.s32 2048, 2048
      %47 = vsyncadd [#allocation6], %s46
      %s48 = sshll.u32 [#allocation7], 4
      %s49 = int_to_ptr.vmem [resolvable:$true] %s48
      %54 = dma.hbm_to_vmem [thread:$0]  %s2, 2048, %s49, [#allocation6], 128, 128, 8
    $region13: #{tpu_custom_call.1} parent=1 // pred_fallthru
      _
    // Predicated region
    $region14: #{tpu_custom_call.1} parent=1 // pred_check
      _
    $region15: #{tpu_custom_call.1} parent=1 // pred_check_branch
      %56 = sbr.rel (0) target = $region17
    $region16: #{tpu_custom_call.1} parent=1 // pred_region
      _
    $region17: #{tpu_custom_call.1} parent=1 // pred_fallthru
      _
    // Predicated region
    $region18: #{tpu_custom_call.1} parent=1 // pred_check
      _
    $region19: #{tpu_custom_call.1} parent=1 // pred_check_branch
      %58 = sbr.rel (0) target = $region21
    $region20: #{tpu_custom_call.1} parent=1 // pred_region
      %s60 = ssub.s32 6144, 6144
      %61 = vsyncadd [#allocation9], %s60
      %s62 = sshll.u32 [#allocation8], 4
      %s63 = int_to_ptr.vmem [resolvable:$true] %s62
      %68 = dma.hbm_to_vmem [thread:$0]  %s4, 6144, %s63, [#allocation9], 384, 384, 24
    $region21: #{tpu_custom_call.1} parent=1 // pred_fallthru
      _
    // Predicated region
    $region22: #{tpu_custom_call.1} parent=1 // pred_check
      _
    $region23: #{tpu_custom_call.1} parent=1 // pred_check_branch
      %70 = sbr.rel (0) target = $region25
    $region24: #{tpu_custom_call.1} parent=1 // pred_region
      %s72 = ssub.s32 6144, 6144
      %73 = vsyncadd [#allocation9], %s72
      %s74 = sshll.u32 [#allocation10], 4
      %s75 = int_to_ptr.vmem [resolvable:$true] %s74
      %80 = dma.hbm_to_vmem [thread:$0]  %s5, 6144, %s75, [#allocation9], 384, 384, 24
    $region25: #{tpu_custom_call.1} parent=1 // pred_fallthru
      _
    // Predicated region
    $region26: #{tpu_custom_call.1} parent=1 // pred_check
      _
    $region27: #{tpu_custom_call.1} parent=1 // pred_check_branch
      %82 = sbr.rel (0) target = $region29
    $region28: #{tpu_custom_call.1} parent=1 // pred_region
      _
    $region29: #{tpu_custom_call.1} parent=1 // pred_fallthru
      _
    // Predicated region
    $region30: #{tpu_custom_call.1} parent=1 // pred_check
      _
    $region31: #{tpu_custom_call.1} parent=1 // pred_check_branch
      %84 = sbr.rel (0) target = $region33
    $region32: #{tpu_custom_call.1} parent=1 // pred_region
      _
    $region33: #{tpu_custom_call.1} parent=1 // pred_fallthru
      _
    // Predicated region
    $region34: #{tpu_custom_call.1} parent=1 // pred_check
      _
    $region35: #{tpu_custom_call.1} parent=1 // pred_check_branch
      %86 = sbr.rel (0) target = $region37
    $region36: #{tpu_custom_call.1} parent=1 // pred_region
      %s88 = ssub.s32 2048, 2048
      %89 = vsyncadd [#allocation12], %s88
      %s90 = sshll.u32 [#allocation11], 4
      %s91 = int_to_ptr.vmem [resolvable:$true] %s90
      %96 = dma.hbm_to_vmem [thread:$0]  %s8, 2048, %s91, [#allocation12], 128, 128, 8
    $region37: #{tpu_custom_call.1} parent=1 // pred_fallthru
      _
    // Predicated region
    $region38: #{tpu_custom_call.1} parent=1 // pred_check
      _
    $region39: #{tpu_custom_call.1} parent=1 // pred_check_branch
      %98 = sbr.rel (0) target = $region41
    $region40: #{tpu_custom_call.1} parent=1 // pred_region
      _
    $region41: #{tpu_custom_call.1} parent=1 // pred_fallthru
      _
    // Predicated region
    $region42: #{tpu_custom_call.1} parent=1 // pred_check
      _
    $region43: #{tpu_custom_call.1} parent=1 // pred_check_branch
      %100 = sbr.rel (0) target = $region45
    $region44: #{tpu_custom_call.1} parent=1 // pred_region
      %101 = dma.done [#allocation3], 128
    $region45: #{tpu_custom_call.1} parent=1 // pred_fallthru
      _
    // Predicated region
    $region46: #{tpu_custom_call.1} parent=1 // pred_check
      _
    $region47: #{tpu_custom_call.1} parent=1 // pred_check_branch
      %103 = sbr.rel (0) target = $region49
    $region48: #{tpu_custom_call.1} parent=1 // pred_region
      %104 = dma.done [#allocation6], 128
    $region49: #{tpu_custom_call.1} parent=1 // pred_fallthru
      _
    // Predicated region
    $region50: #{tpu_custom_call.1} parent=1 // pred_check
      _
    $region51: #{tpu_custom_call.1} parent=1 // pred_check_branch
      %106 = sbr.rel (0) target = $region53
    $region52: #{tpu_custom_call.1} parent=1 // pred_region
      %107 = dma.done [#allocation6], 2048
    $region53: #{tpu_custom_call.1} parent=1 // pred_fallthru
      _
    // Predicated region
    $region54: #{tpu_custom_call.1} parent=1 // pred_check
      _
    $region55: #{tpu_custom_call.1} parent=1 // pred_check_branch
      %109 = sbr.rel (0) target = $region57
    $region56: #{tpu_custom_call.1} parent=1 // pred_region
      %110 = dma.done [#allocation9], 6144
    $region57: #{tpu_custom_call.1} parent=1 // pred_fallthru
      _
    // Predicated region
    $region58: #{tpu_custom_call.1} parent=1 // pred_check
      _
    $region59: #{tpu_custom_call.1} parent=1 // pred_check_branch
      %112 = sbr.rel (0) target = $region61
    $region60: #{tpu_custom_call.1} parent=1 // pred_region
      %113 = dma.done [#allocation9], 6144
    $region61: #{tpu_custom_call.1} parent=1 // pred_fallthru
      _
    // Predicated region
    $region62: #{tpu_custom_call.1} parent=1 // pred_check
      _
    $region63: #{tpu_custom_call.1} parent=1 // pred_check_branch
      %115 = sbr.rel (0) target = $region65
    $region64: #{tpu_custom_call.1} parent=1 // pred_region
      %116 = dma.done [#allocation12], 2048
    $region65: #{tpu_custom_call.1} parent=1 // pred_fallthru
      _
    %v117 = vld [vmem:[#allocation2] sm:$0xff]
    %v118 = vld [vmem:[#allocation5] sm:$0xff]
    %v119 = vld [vmem:[#allocation7] sm:$0xff]
    %v120 = vld [vmem:[#allocation7 + $0x8] sm:$0xff]
    %v121 = vld [vmem:[#allocation7 + $0x10] sm:$0xff]
    %v122 = vld [vmem:[#allocation7 + $0x18] sm:$0xff]
    %v123 = vld [vmem:[#allocation7 + $0x20] sm:$0xff]
    %v124 = vld [vmem:[#allocation7 + $0x28] sm:$0xff]
    %v125 = vld [vmem:[#allocation7 + $0x30] sm:$0xff]
    %v126 = vld [vmem:[#allocation7 + $0x38] sm:$0xff]
    %v127 = vld [vmem:[#allocation7 + $0x40] sm:$0xff]
    %v128 = vld [vmem:[#allocation7 + $0x48] sm:$0xff]
    %v129 = vld [vmem:[#allocation7 + $0x50] sm:$0xff]
    %v130 = vld [vmem:[#allocation7 + $0x58] sm:$0xff]
    %v131 = vld [vmem:[#allocation7 + $0x60] sm:$0xff]
    %v132 = vld [vmem:[#allocation7 + $0x68] sm:$0xff]
    %v133 = vld [vmem:[#allocation7 + $0x70] sm:$0xff]
    %v134 = vld [vmem:[#allocation7 + $0x78] sm:$0xff]
    %v135 = vld [vmem:[%s3] sm:$0x1]
    %v137 = vlaneseq
    %v138 = vshrl.u32 %v137, 7
    %v139 = vsub.s32 0, %v138
    %v140 = vrot.slane %v135, %v139
    %142 = vmatprep.subr.mxu0 0.0
    %143 = vmatpush1.msra.mxu0 %v134
    %144 = vmatprep.subr.mxu0 0.0
    %145 = vmatpush1.msra.mxu0 %v133
    %146 = vmatprep.subr.mxu0 0.0
    %147 = vmatpush1.msra.mxu0 %v132
    %148 = vmatprep.subr.mxu0 0.0
    %149 = vmatpush1.msra.mxu0 %v131
    %150 = vmatprep.subr.mxu0 0.0
    %151 = vmatpush1.msra.mxu0 %v130
    %152 = vmatprep.subr.mxu0 0.0
    %153 = vmatpush1.msra.mxu0 %v129
    %154 = vmatprep.subr.mxu0 0.0
    %155 = vmatpush1.msra.mxu0 %v128
    %156 = vmatprep.subr.mxu0 0.0
    %157 = vmatpush1.msra.mxu0 %v127
    %158 = vmatprep.subr.mxu0 0.0
    %159 = vmatpush1.msra.mxu0 %v126
    %160 = vmatprep.subr.mxu0 0.0
    %161 = vmatpush1.msra.mxu0 %v125
    %162 = vmatprep.subr.mxu0 0.0
    %163 = vmatpush1.msra.mxu0 %v124
    %164 = vmatprep.subr.mxu0 0.0
    %165 = vmatpush1.msra.mxu0 %v123
    %166 = vmatprep.subr.mxu0 0.0
    %167 = vmatpush1.msra.mxu0 %v122
    %168 = vmatprep.subr.mxu0 0.0
    %169 = vmatpush1.msra.mxu0 %v121
    %170 = vmatprep.subr.mxu0 0.0
    %171 = vmatpush1.msra.mxu0 %v120
    %172 = vmatprep.subr.mxu0 0.0
    %173 = vmatpush1.msra.mxu0 %v119
    %174 = vmatprep.subr.mxu0 0.0
    %175 = vmatpush2.msra.mxu0 0.0
    %176 = vmatprep.subr.mxu0 0.0
    %177 = vmatpush2.msra.mxu0 0.0
    %178 = vmatprep.subr.mxu0 0.0
    %179 = vmatpush2.msra.mxu0 0.0
    %180 = vmatprep.subr.mxu0 0.0
    %181 = vmatpush2.msra.mxu0 0.0
    %182 = vmatprep.subr.mxu0 0.0
    %183 = vmatpush2.msra.mxu0 0.0
    %184 = vmatprep.subr.mxu0 0.0
    %185 = vmatpush2.msra.mxu0 0.0
    %186 = vmatprep.subr.mxu0 0.0
    %187 = vmatpush2.msra.mxu0 0.0
    %188 = vmatprep.subr.mxu0 0.0
    %189 = vmatpush2.msra.mxu0 0.0
    %190 = vmatprep.subr.mxu0 0.0
    %191 = vmatpush2.msra.mxu0 0.0
    %192 = vmatprep.subr.mxu0 0.0
    %193 = vmatpush2.msra.mxu0 0.0
    %194 = vmatprep.subr.mxu0 0.0
    %195 = vmatpush2.msra.mxu0 0.0
    %196 = vmatprep.subr.mxu0 0.0
    %197 = vmatpush2.msra.mxu0 0.0
    %198 = vmatprep.subr.mxu0 0.0
    %199 = vmatpush2.msra.mxu0 0.0
    %200 = vmatprep.subr.mxu0 0.0
    %201 = vmatpush2.msra.mxu0 0.0
    %202 = vmatprep.subr.mxu0 0.0
    %203 = vmatpush2.msra.mxu0 0.0
    %204 = vmatprep.subr.mxu0 0.0
    %205 = vmatpush2.msra.mxu0 0.0
    %206 = vmatprep.mubr.f32.mxu0 0.0
    %207 = vmatmul.mubr.f32.gmra.mxu0 %v117
    %v208 = vpop.f32.mrf.mxu0
    %v209 = vadd.f32 %v140, %v208
    %v210 = vpop.f32.mrf.mxu0
    %211 = vdwg.mxu0
    %v212 = vmax.f32 %v209, 0.0
    %v213 = vld [vmem:[#allocation8] sm:$0xff]
    %v214 = vld [vmem:[#allocation8 + $0x8] sm:$0xff]
    %v215 = vld [vmem:[#allocation8 + $0x10] sm:$0xff]
    %v216 = vld [vmem:[#allocation8 + $0x18] sm:$0xff]
    %v217 = vld [vmem:[#allocation8 + $0x20] sm:$0xff]
    %v218 = vld [vmem:[#allocation8 + $0x28] sm:$0xff]
    %v219 = vld [vmem:[#allocation8 + $0x30] sm:$0xff]
    %v220 = vld [vmem:[#allocation8 + $0x38] sm:$0xff]
    %v221 = vld [vmem:[#allocation8 + $0x40] sm:$0xff]
    %v222 = vld [vmem:[#allocation8 + $0x48] sm:$0xff]
    %v223 = vld [vmem:[#allocation8 + $0x50] sm:$0xff]
    %v224 = vld [vmem:[#allocation8 + $0x58] sm:$0xff]
    %v225 = vld [vmem:[#allocation8 + $0x60] sm:$0xff]
    %v226 = vld [vmem:[#allocation8 + $0x68] sm:$0xff]
    %v227 = vld [vmem:[#allocation8 + $0x70] sm:$0xff]
    %v228 = vld [vmem:[#allocation8 + $0x78] sm:$0xff]
    %v229 = vld [vmem:[#allocation8 + $0x80] sm:$0xff]
    %v230 = vld [vmem:[#allocation8 + $0x88] sm:$0xff]
    %v231 = vld [vmem:[#allocation8 + $0x90] sm:$0xff]
    %v232 = vld [vmem:[#allocation8 + $0x98] sm:$0xff]
    %v233 = vld [vmem:[#allocation8 + $0xa0] sm:$0xff]
    %v234 = vld [vmem:[#allocation8 + $0xa8] sm:$0xff]
    %v235 = vld [vmem:[#allocation8 + $0xb0] sm:$0xff]
    %v236 = vld [vmem:[#allocation8 + $0xb8] sm:$0xff]
    %v237 = vld [vmem:[#allocation8 + $0xc0] sm:$0xff]
    %v238 = vld [vmem:[#allocation8 + $0xc8] sm:$0xff]
    %v239 = vld [vmem:[#allocation8 + $0xd0] sm:$0xff]
    %v240 = vld [vmem:[#allocation8 + $0xd8] sm:$0xff]
    %v241 = vld [vmem:[#allocation8 + $0xe0] sm:$0xff]
    %v242 = vld [vmem:[#allocation8 + $0xe8] sm:$0xff]
    %v243 = vld [vmem:[#allocation8 + $0xf0] sm:$0xff]
    %v244 = vld [vmem:[#allocation8 + $0xf8] sm:$0xff]
    %v245 = vld [vmem:[#allocation8 + $0x100] sm:$0xff]
    %v246 = vld [vmem:[#allocation8 + $0x108] sm:$0xff]
    %v247 = vld [vmem:[#allocation8 + $0x110] sm:$0xff]
    %v248 = vld [vmem:[#allocation8 + $0x118] sm:$0xff]
    %v249 = vld [vmem:[#allocation8 + $0x120] sm:$0xff]
    %v250 = vld [vmem:[#allocation8 + $0x128] sm:$0xff]
    %v251 = vld [vmem:[#allocation8 + $0x130] sm:$0xff]
    %v252 = vld [vmem:[#allocation8 + $0x138] sm:$0xff]
    %v253 = vld [vmem:[#allocation8 + $0x140] sm:$0xff]
    %v254 = vld [vmem:[#allocation8 + $0x148] sm:$0xff]
    %v255 = vld [vmem:[#allocation8 + $0x150] sm:$0xff]
    %v256 = vld [vmem:[#allocation8 + $0x158] sm:$0xff]
    %v257 = vld [vmem:[#allocation8 + $0x160] sm:$0xff]
    %v258 = vld [vmem:[#allocation8 + $0x168] sm:$0xff]
    %v259 = vld [vmem:[#allocation8 + $0x170] sm:$0xff]
    %v260 = vld [vmem:[#allocation8 + $0x178] sm:$0xff]
    %v261 = vld [vmem:[%s6] sm:$0x7]
    %v263 = vlaneseq
    %v264 = vshrl.u32 %v263, 7
    %v265 = vsub.s32 0, %v264
    %v266 = vrot.slane %v261, %v265
    %v267 = vlaneseq
    %v268 = vshrl.u32 %v267, 7
    %v269 = vsub.s32 1, %v268
    %v270 = vrot.slane %v261, %v269
    %v271 = vlaneseq
    %v272 = vshrl.u32 %v271, 7
    %v273 = vsub.s32 2, %v272
    %v274 = vrot.slane %v261, %v273
    %278 = vmatprep.subr.mxu0 %v259
    %279 = vmatpush1.msra.mxu0 %v258
    %280 = vmatprep.subr.mxu0 %v256
    %281 = vmatpush1.msra.mxu0 %v255
    %282 = vmatprep.subr.mxu0 %v253
    %283 = vmatpush1.msra.mxu0 %v252
    %284 = vmatprep.subr.mxu0 %v250
    %285 = vmatpush1.msra.mxu0 %v249
    %286 = vmatprep.subr.mxu0 %v247
    %287 = vmatpush1.msra.mxu0 %v246
    %288 = vmatprep.subr.mxu0 %v244
    %289 = vmatpush1.msra.mxu0 %v243
    %290 = vmatprep.subr.mxu0 %v241
    %291 = vmatpush1.msra.mxu0 %v240
    %292 = vmatprep.subr.mxu0 %v238
    %293 = vmatpush1.msra.mxu0 %v237
    %294 = vmatprep.subr.mxu0 %v235
    %295 = vmatpush1.msra.mxu0 %v234
    %296 = vmatprep.subr.mxu0 %v232
    %297 = vmatpush1.msra.mxu0 %v231
    %298 = vmatprep.subr.mxu0 %v229
    %299 = vmatpush1.msra.mxu0 %v228
    %300 = vmatprep.subr.mxu0 %v226
    %301 = vmatpush1.msra.mxu0 %v225
    %302 = vmatprep.subr.mxu0 %v223
    %303 = vmatpush1.msra.mxu0 %v222
    %304 = vmatprep.subr.mxu0 %v220
    %305 = vmatpush1.msra.mxu0 %v219
    %306 = vmatprep.subr.mxu0 %v217
    %307 = vmatpush1.msra.mxu0 %v216
    %308 = vmatprep.subr.mxu0 %v214
    %309 = vmatpush1.msra.mxu0 %v213
    %310 = vmatprep.subr.mxu0 0.0
    %311 = vmatpush2.msra.mxu0 0.0
    %312 = vmatprep.subr.mxu0 0.0
    %313 = vmatpush2.msra.mxu0 0.0
    %314 = vmatprep.subr.mxu0 0.0
    %315 = vmatpush2.msra.mxu0 0.0
    %316 = vmatprep.subr.mxu0 0.0
    %317 = vmatpush2.msra.mxu0 0.0
    %318 = vmatprep.subr.mxu0 0.0
    %319 = vmatpush2.msra.mxu0 0.0
    %320 = vmatprep.subr.mxu0 0.0
    %321 = vmatpush2.msra.mxu0 0.0
    %322 = vmatprep.subr.mxu0 0.0
    %323 = vmatpush2.msra.mxu0 0.0
    %324 = vmatprep.subr.mxu0 0.0
    %325 = vmatpush2.msra.mxu0 0.0
    %326 = vmatprep.subr.mxu0 0.0
    %327 = vmatpush2.msra.mxu0 0.0
    %328 = vmatprep.subr.mxu0 0.0
    %329 = vmatpush2.msra.mxu0 0.0
    %330 = vmatprep.subr.mxu0 0.0
    %331 = vmatpush2.msra.mxu0 0.0
    %332 = vmatprep.subr.mxu0 0.0
    %333 = vmatpush2.msra.mxu0 0.0
    %334 = vmatprep.subr.mxu0 0.0
    %335 = vmatpush2.msra.mxu0 0.0
    %336 = vmatprep.subr.mxu0 0.0
    %337 = vmatpush2.msra.mxu0 0.0
    %338 = vmatprep.subr.mxu0 0.0
    %339 = vmatpush2.msra.mxu0 0.0
    %340 = vmatprep.subr.mxu0 0.0
    %341 = vmatpush2.msra.mxu0 0.0
    %342 = vmatprep.mubr.f32.mxu0 0.0
    %343 = vmatmul.mubr.f32.gmra.mxu0 %v212
    %v344 = vpop.f32.mrf.mxu0
    %v345 = vadd.f32 %v266, %v344
    %v346 = vpop.f32.mrf.mxu0
    %v347 = vadd.f32 %v270, %v346
    %348 = vdwg.mxu0
    %349 = vmatprep.subr.mxu0 0.0
    %350 = vmatpush1.msra.mxu0 %v260
    %351 = vmatprep.subr.mxu0 0.0
    %352 = vmatpush1.msra.mxu0 %v257
    %353 = vmatprep.subr.mxu0 0.0
    %354 = vmatpush1.msra.mxu0 %v254
    %355 = vmatprep.subr.mxu0 0.0
    %356 = vmatpush1.msra.mxu0 %v251
    %357 = vmatprep.subr.mxu0 0.0
    %358 = vmatpush1.msra.mxu0 %v248
    %359 = vmatprep.subr.mxu0 0.0
    %360 = vmatpush1.msra.mxu0 %v245
    %361 = vmatprep.subr.mxu0 0.0
    %362 = vmatpush1.msra.mxu0 %v242
    %363 = vmatprep.subr.mxu0 0.0
    %364 = vmatpush1.msra.mxu0 %v239
    %365 = vmatprep.subr.mxu0 0.0
    %366 = vmatpush1.msra.mxu0 %v236
    %367 = vmatprep.subr.mxu0 0.0
    %368 = vmatpush1.msra.mxu0 %v233
    %369 = vmatprep.subr.mxu0 0.0
    %370 = vmatpush1.msra.mxu0 %v230
    %371 = vmatprep.subr.mxu0 0.0
    %372 = vmatpush1.msra.mxu0 %v227
    %373 = vmatprep.subr.mxu0 0.0
    %374 = vmatpush1.msra.mxu0 %v224
    %375 = vmatprep.subr.mxu0 0.0
    %376 = vmatpush1.msra.mxu0 %v221
    %377 = vmatprep.subr.mxu0 0.0
    %378 = vmatpush1.msra.mxu0 %v218
    %379 = vmatprep.subr.mxu0 0.0
    %380 = vmatpush1.msra.mxu0 %v215
    %381 = vmatprep.subr.mxu0 0.0
    %382 = vmatpush2.msra.mxu0 0.0
    %383 = vmatprep.subr.mxu0 0.0
    %384 = vmatpush2.msra.mxu0 0.0
    %385 = vmatprep.subr.mxu0 0.0
    %386 = vmatpush2.msra.mxu0 0.0
    %387 = vmatprep.subr.mxu0 0.0
    %388 = vmatpush2.msra.mxu0 0.0
    %389 = vmatprep.subr.mxu0 0.0
    %390 = vmatpush2.msra.mxu0 0.0
    %391 = vmatprep.subr.mxu0 0.0
    %392 = vmatpush2.msra.mxu0 0.0
    %393 = vmatprep.subr.mxu0 0.0
    %394 = vmatpush2.msra.mxu0 0.0
    %395 = vmatprep.subr.mxu0 0.0
    %396 = vmatpush2.msra.mxu0 0.0
    %397 = vmatprep.subr.mxu0 0.0
    %398 = vmatpush2.msra.mxu0 0.0
    %399 = vmatprep.subr.mxu0 0.0
    %400 = vmatpush2.msra.mxu0 0.0
    %401 = vmatprep.subr.mxu0 0.0
    %402 = vmatpush2.msra.mxu0 0.0
    %403 = vmatprep.subr.mxu0 0.0
    %404 = vmatpush2.msra.mxu0 0.0
    %405 = vmatprep.subr.mxu0 0.0
    %406 = vmatpush2.msra.mxu0 0.0
    %407 = vmatprep.subr.mxu0 0.0
    %408 = vmatpush2.msra.mxu0 0.0
    %409 = vmatprep.subr.mxu0 0.0
    %410 = vmatpush2.msra.mxu0 0.0
    %411 = vmatprep.subr.mxu0 0.0
    %412 = vmatpush2.msra.mxu0 0.0
    %413 = vmatprep.mubr.f32.mxu0 0.0
    %414 = vmatmul.mubr.f32.gmra.mxu0 %v212
    %v415 = vpop.f32.mrf.mxu0
    %v416 = vadd.f32 %v274, %v415
    %v417 = vpop.f32.mrf.mxu0
    %418 = vdwg.mxu0
    %v419 = vld [vmem:[#allocation10] sm:$0xff]
    %v420 = vld [vmem:[#allocation10 + $0x8] sm:$0xff]
    %v421 = vld [vmem:[#allocation10 + $0x10] sm:$0xff]
    %v422 = vld [vmem:[#allocation10 + $0x18] sm:$0xff]
    %v423 = vld [vmem:[#allocation10 + $0x20] sm:$0xff]
    %v424 = vld [vmem:[#allocation10 + $0x28] sm:$0xff]
    %v425 = vld [vmem:[#allocation10 + $0x30] sm:$0xff]
    %v426 = vld [vmem:[#allocation10 + $0x38] sm:$0xff]
    %v427 = vld [vmem:[#allocation10 + $0x40] sm:$0xff]
    %v428 = vld [vmem:[#allocation10 + $0x48] sm:$0xff]
    %v429 = vld [vmem:[#allocation10 + $0x50] sm:$0xff]
    %v430 = vld [vmem:[#allocation10 + $0x58] sm:$0xff]
    %v431 = vld [vmem:[#allocation10 + $0x60] sm:$0xff]
    %v432 = vld [vmem:[#allocation10 + $0x68] sm:$0xff]
    %v433 = vld [vmem:[#allocation10 + $0x70] sm:$0xff]
    %v434 = vld [vmem:[#allocation10 + $0x78] sm:$0xff]
    %v435 = vld [vmem:[#allocation10 + $0x80] sm:$0xff]
    %v436 = vld [vmem:[#allocation10 + $0x88] sm:$0xff]
    %v437 = vld [vmem:[#allocation10 + $0x90] sm:$0xff]
    %v438 = vld [vmem:[#allocation10 + $0x98] sm:$0xff]
    %v439 = vld [vmem:[#allocation10 + $0xa0] sm:$0xff]
    %v440 = vld [vmem:[#allocation10 + $0xa8] sm:$0xff]
    %v441 = vld [vmem:[#allocation10 + $0xb0] sm:$0xff]
    %v442 = vld [vmem:[#allocation10 + $0xb8] sm:$0xff]
    %v443 = vld [vmem:[#allocation10 + $0xc0] sm:$0xff]
    %v444 = vld [vmem:[#allocation10 + $0xc8] sm:$0xff]
    %v445 = vld [vmem:[#allocation10 + $0xd0] sm:$0xff]
    %v446 = vld [vmem:[#allocation10 + $0xd8] sm:$0xff]
    %v447 = vld [vmem:[#allocation10 + $0xe0] sm:$0xff]
    %v448 = vld [vmem:[#allocation10 + $0xe8] sm:$0xff]
    %v449 = vld [vmem:[#allocation10 + $0xf0] sm:$0xff]
    %v450 = vld [vmem:[#allocation10 + $0xf8] sm:$0xff]
    %v451 = vld [vmem:[#allocation10 + $0x100] sm:$0xff]
    %v452 = vld [vmem:[#allocation10 + $0x108] sm:$0xff]
    %v453 = vld [vmem:[#allocation10 + $0x110] sm:$0xff]
    %v454 = vld [vmem:[#allocation10 + $0x118] sm:$0xff]
    %v455 = vld [vmem:[#allocation10 + $0x120] sm:$0xff]
    %v456 = vld [vmem:[#allocation10 + $0x128] sm:$0xff]
    %v457 = vld [vmem:[#allocation10 + $0x130] sm:$0xff]
    %v458 = vld [vmem:[#allocation10 + $0x138] sm:$0xff]
    %v459 = vld [vmem:[#allocation10 + $0x140] sm:$0xff]
    %v460 = vld [vmem:[#allocation10 + $0x148] sm:$0xff]
    %v461 = vld [vmem:[#allocation10 + $0x150] sm:$0xff]
    %v462 = vld [vmem:[#allocation10 + $0x158] sm:$0xff]
    %v463 = vld [vmem:[#allocation10 + $0x160] sm:$0xff]
    %v464 = vld [vmem:[#allocation10 + $0x168] sm:$0xff]
    %v465 = vld [vmem:[#allocation10 + $0x170] sm:$0xff]
    %v466 = vld [vmem:[#allocation10 + $0x178] sm:$0xff]
    %467 = vmatprep.subr.mxu0 %v465
    %468 = vmatpush1.msra.mxu0 %v464
    %469 = vmatprep.subr.mxu0 %v462
    %470 = vmatpush1.msra.mxu0 %v461
    %471 = vmatprep.subr.mxu0 %v459
    %472 = vmatpush1.msra.mxu0 %v458
    %473 = vmatprep.subr.mxu0 %v456
    %474 = vmatpush1.msra.mxu0 %v455
    %475 = vmatprep.subr.mxu0 %v453
    %476 = vmatpush1.msra.mxu0 %v452
    %477 = vmatprep.subr.mxu0 %v450
    %478 = vmatpush1.msra.mxu0 %v449
    %479 = vmatprep.subr.mxu0 %v447
    %480 = vmatpush1.msra.mxu0 %v446
    %481 = vmatprep.subr.mxu0 %v444
    %482 = vmatpush1.msra.mxu0 %v443
    %483 = vmatprep.subr.mxu0 %v441
    %484 = vmatpush1.msra.mxu0 %v440
    %485 = vmatprep.subr.mxu0 %v438
    %486 = vmatpush1.msra.mxu0 %v437
    %487 = vmatprep.subr.mxu0 %v435
    %488 = vmatpush1.msra.mxu0 %v434
    %489 = vmatprep.subr.mxu0 %v432
    %490 = vmatpush1.msra.mxu0 %v431
    %491 = vmatprep.subr.mxu0 %v429
    %492 = vmatpush1.msra.mxu0 %v428
    %493 = vmatprep.subr.mxu0 %v426
    %494 = vmatpush1.msra.mxu0 %v425
    %495 = vmatprep.subr.mxu0 %v423
    %496 = vmatpush1.msra.mxu0 %v422
    %497 = vmatprep.subr.mxu0 %v420
    %498 = vmatpush1.msra.mxu0 %v419
    %499 = vmatprep.subr.mxu0 0.0
    %500 = vmatpush2.msra.mxu0 0.0
    %501 = vmatprep.subr.mxu0 0.0
    %502 = vmatpush2.msra.mxu0 0.0
    %503 = vmatprep.subr.mxu0 0.0
    %504 = vmatpush2.msra.mxu0 0.0
    %505 = vmatprep.subr.mxu0 0.0
    %506 = vmatpush2.msra.mxu0 0.0
    %507 = vmatprep.subr.mxu0 0.0
    %508 = vmatpush2.msra.mxu0 0.0
    %509 = vmatprep.subr.mxu0 0.0
    %510 = vmatpush2.msra.mxu0 0.0
    %511 = vmatprep.subr.mxu0 0.0
    %512 = vmatpush2.msra.mxu0 0.0
    %513 = vmatprep.subr.mxu0 0.0
    %514 = vmatpush2.msra.mxu0 0.0
    %515 = vmatprep.subr.mxu0 0.0
    %516 = vmatpush2.msra.mxu0 0.0
    %517 = vmatprep.subr.mxu0 0.0
    %518 = vmatpush2.msra.mxu0 0.0
    %519 = vmatprep.subr.mxu0 0.0
    %520 = vmatpush2.msra.mxu0 0.0
    %521 = vmatprep.subr.mxu0 0.0
    %522 = vmatpush2.msra.mxu0 0.0
    %523 = vmatprep.subr.mxu0 0.0
    %524 = vmatpush2.msra.mxu0 0.0
    %525 = vmatprep.subr.mxu0 0.0
    %526 = vmatpush2.msra.mxu0 0.0
    %527 = vmatprep.subr.mxu0 0.0
    %528 = vmatpush2.msra.mxu0 0.0
    %529 = vmatprep.subr.mxu0 0.0
    %530 = vmatpush2.msra.mxu0 0.0
    %531 = vmatprep.mubr.f32.mxu0 0.0
    %532 = vmatmul.mubr.f32.gmra.mxu0 %v118
    %v533 = vpop.f32.mrf.mxu0
    %v534 = vadd.f32 0.0, %v533
    %v535 = vpop.f32.mrf.mxu0
    %v536 = vadd.f32 0.0, %v535
    %537 = vdwg.mxu0
    %538 = vmatprep.subr.mxu0 0.0
    %539 = vmatpush1.msra.mxu0 %v466
    %540 = vmatprep.subr.mxu0 0.0
    %541 = vmatpush1.msra.mxu0 %v463
    %542 = vmatprep.subr.mxu0 0.0
    %543 = vmatpush1.msra.mxu0 %v460
    %544 = vmatprep.subr.mxu0 0.0
    %545 = vmatpush1.msra.mxu0 %v457
    %546 = vmatprep.subr.mxu0 0.0
    %547 = vmatpush1.msra.mxu0 %v454
    %548 = vmatprep.subr.mxu0 0.0
    %549 = vmatpush1.msra.mxu0 %v451
    %550 = vmatprep.subr.mxu0 0.0
    %551 = vmatpush1.msra.mxu0 %v448
    %552 = vmatprep.subr.mxu0 0.0
    %553 = vmatpush1.msra.mxu0 %v445
    %554 = vmatprep.subr.mxu0 0.0
    %555 = vmatpush1.msra.mxu0 %v442
    %556 = vmatprep.subr.mxu0 0.0
    %557 = vmatpush1.msra.mxu0 %v439
    %558 = vmatprep.subr.mxu0 0.0
    %559 = vmatpush1.msra.mxu0 %v436
    %560 = vmatprep.subr.mxu0 0.0
    %561 = vmatpush1.msra.mxu0 %v433
    %562 = vmatprep.subr.mxu0 0.0
    %563 = vmatpush1.msra.mxu0 %v430
    %564 = vmatprep.subr.mxu0 0.0
    %565 = vmatpush1.msra.mxu0 %v427
    %566 = vmatprep.subr.mxu0 0.0
    %567 = vmatpush1.msra.mxu0 %v424
    %568 = vmatprep.subr.mxu0 0.0
    %569 = vmatpush1.msra.mxu0 %v421
    %570 = vmatprep.subr.mxu0 0.0
    %571 = vmatpush2.msra.mxu0 0.0
    %572 = vmatprep.subr.mxu0 0.0
    %573 = vmatpush2.msra.mxu0 0.0
    %574 = vmatprep.subr.mxu0 0.0
    %575 = vmatpush2.msra.mxu0 0.0
    %576 = vmatprep.subr.mxu0 0.0
    %577 = vmatpush2.msra.mxu0 0.0
    %578 = vmatprep.subr.mxu0 0.0
    %579 = vmatpush2.msra.mxu0 0.0
    %580 = vmatprep.subr.mxu0 0.0
    %581 = vmatpush2.msra.mxu0 0.0
    %582 = vmatprep.subr.mxu0 0.0
    %583 = vmatpush2.msra.mxu0 0.0
    %584 = vmatprep.subr.mxu0 0.0
    %585 = vmatpush2.msra.mxu0 0.0
    %586 = vmatprep.subr.mxu0 0.0
    %587 = vmatpush2.msra.mxu0 0.0
    %588 = vmatprep.subr.mxu0 0.0
    %589 = vmatpush2.msra.mxu0 0.0
    %590 = vmatprep.subr.mxu0 0.0
    %591 = vmatpush2.msra.mxu0 0.0
    %592 = vmatprep.subr.mxu0 0.0
    %593 = vmatpush2.msra.mxu0 0.0
    %594 = vmatprep.subr.mxu0 0.0
    %595 = vmatpush2.msra.mxu0 0.0
    %596 = vmatprep.subr.mxu0 0.0
    %597 = vmatpush2.msra.mxu0 0.0
    %598 = vmatprep.subr.mxu0 0.0
    %599 = vmatpush2.msra.mxu0 0.0
    %600 = vmatprep.subr.mxu0 0.0
    %601 = vmatpush2.msra.mxu0 0.0
    %602 = vmatprep.mubr.f32.mxu0 0.0
    %603 = vmatmul.mubr.f32.gmra.mxu0 %v118
    %v604 = vpop.f32.mrf.mxu0
    %v605 = vadd.f32 0.0, %v604
    %v606 = vpop.f32.mrf.mxu0
    %607 = vdwg.mxu0
    %v608 = vadd.f32 %v345, %v534
    %v609 = vadd.f32 %v347, %v536
    %v610 = vxor.u32 %v608, 2147483648
    %v611 = vxor.u32 %v609, 2147483648
    %v612 = vmul.f32 %v610, 1.442695
    %v613 = vpow.pop %v612
    %v614 = vmul.f32 %v611, 1.442695
    %v615 = vpow.pop %v614
    %v616 = vadd.f32 %v613, 1.0
    %v617 = vadd.f32 %v615, 1.0
    %v618 = vrcp.pop %v616
    %v619 = vmul.f32 1.0, %v618
    %v620 = vrcp.pop %v617
    %v621 = vmul.f32 1.0, %v620
    %v622 = vld [vmem:[%s7] sm:$0x1]
    %v624 = vlaneseq
    %v625 = vshrl.u32 %v624, 7
    %v626 = vsub.s32 0, %v625
    %v627 = vrot.slane %v622, %v626
    %v629 = vadd.f32 %v605, %v627
    %v630 = vmul.f32 %v619, %v629
    %v631 = vadd.f32 %v416, %v630
    %v632 = vtanh.pop %v631
    %v633 = vsub.f32 %v118, %v632
    %v634 = vmul.f32 %v621, %v633
    %v635 = vadd.f32 %v632, %v634
    %v636 = vld [vmem:[#allocation11] sm:$0xff]
    %v637 = vld [vmem:[#allocation11 + $0x8] sm:$0xff]
    %v638 = vld [vmem:[#allocation11 + $0x10] sm:$0xff]
    %v639 = vld [vmem:[#allocation11 + $0x18] sm:$0xff]
    %v640 = vld [vmem:[#allocation11 + $0x20] sm:$0xff]
    %v641 = vld [vmem:[#allocation11 + $0x28] sm:$0xff]
    %v642 = vld [vmem:[#allocation11 + $0x30] sm:$0xff]
    %v643 = vld [vmem:[#allocation11 + $0x38] sm:$0xff]
    %v644 = vld [vmem:[#allocation11 + $0x40] sm:$0xff]
    %v645 = vld [vmem:[#allocation11 + $0x48] sm:$0xff]
    %v646 = vld [vmem:[#allocation11 + $0x50] sm:$0xff]
    %v647 = vld [vmem:[#allocation11 + $0x58] sm:$0xff]
    %v648 = vld [vmem:[#allocation11 + $0x60] sm:$0xff]
    %v649 = vld [vmem:[#allocation11 + $0x68] sm:$0xff]
    %v650 = vld [vmem:[#allocation11 + $0x70] sm:$0xff]
    %v651 = vld [vmem:[#allocation11 + $0x78] sm:$0xff]
    %v652 = vld [vmem:[%s9] sm:$0x1]
    %v654 = vlaneseq
    %v655 = vshrl.u32 %v654, 7
    %v656 = vsub.s32 0, %v655
    %v657 = vrot.slane %v652, %v656
    %659 = vmatprep.subr.mxu0 0.0
    %660 = vmatpush1.msra.mxu0 %v651
    %661 = vmatprep.subr.mxu0 0.0
    %662 = vmatpush1.msra.mxu0 %v650
    %663 = vmatprep.subr.mxu0 0.0
    %664 = vmatpush1.msra.mxu0 %v649
    %665 = vmatprep.subr.mxu0 0.0
    %666 = vmatpush1.msra.mxu0 %v648
    %667 = vmatprep.subr.mxu0 0.0
    %668 = vmatpush1.msra.mxu0 %v647
    %669 = vmatprep.subr.mxu0 0.0
    %670 = vmatpush1.msra.mxu0 %v646
    %671 = vmatprep.subr.mxu0 0.0
    %672 = vmatpush1.msra.mxu0 %v645
    %673 = vmatprep.subr.mxu0 0.0
    %674 = vmatpush1.msra.mxu0 %v644
    %675 = vmatprep.subr.mxu0 0.0
    %676 = vmatpush1.msra.mxu0 %v643
    %677 = vmatprep.subr.mxu0 0.0
    %678 = vmatpush1.msra.mxu0 %v642
    %679 = vmatprep.subr.mxu0 0.0
    %680 = vmatpush1.msra.mxu0 %v641
    %681 = vmatprep.subr.mxu0 0.0
    %682 = vmatpush1.msra.mxu0 %v640
    %683 = vmatprep.subr.mxu0 0.0
    %684 = vmatpush1.msra.mxu0 %v639
    %685 = vmatprep.subr.mxu0 0.0
    %686 = vmatpush1.msra.mxu0 %v638
    %687 = vmatprep.subr.mxu0 0.0
    %688 = vmatpush1.msra.mxu0 %v637
    %689 = vmatprep.subr.mxu0 0.0
    %690 = vmatpush1.msra.mxu0 %v636
    %691 = vmatprep.subr.mxu0 0.0
    %692 = vmatpush2.msra.mxu0 0.0
    %693 = vmatprep.subr.mxu0 0.0
    %694 = vmatpush2.msra.mxu0 0.0
    %695 = vmatprep.subr.mxu0 0.0
    %696 = vmatpush2.msra.mxu0 0.0
    %697 = vmatprep.subr.mxu0 0.0
    %698 = vmatpush2.msra.mxu0 0.0
    %699 = vmatprep.subr.mxu0 0.0
    %700 = vmatpush2.msra.mxu0 0.0
    %701 = vmatprep.subr.mxu0 0.0
    %702 = vmatpush2.msra.mxu0 0.0
    %703 = vmatprep.subr.mxu0 0.0
    %704 = vmatpush2.msra.mxu0 0.0
    %705 = vmatprep.subr.mxu0 0.0
    %706 = vmatpush2.msra.mxu0 0.0
    %707 = vmatprep.subr.mxu0 0.0
    %708 = vmatpush2.msra.mxu0 0.0
    %709 = vmatprep.subr.mxu0 0.0
    %710 = vmatpush2.msra.mxu0 0.0
    %711 = vmatprep.subr.mxu0 0.0
    %712 = vmatpush2.msra.mxu0 0.0
    %713 = vmatprep.subr.mxu0 0.0
    %714 = vmatpush2.msra.mxu0 0.0
    %715 = vmatprep.subr.mxu0 0.0
    %716 = vmatpush2.msra.mxu0 0.0
    %717 = vmatprep.subr.mxu0 0.0
    %718 = vmatpush2.msra.mxu0 0.0
    %719 = vmatprep.subr.mxu0 0.0
    %720 = vmatpush2.msra.mxu0 0.0
    %721 = vmatprep.subr.mxu0 0.0
    %722 = vmatpush2.msra.mxu0 0.0
    %723 = vmatprep.mubr.f32.mxu0 0.0
    %724 = vmatmul.mubr.f32.gmra.mxu0 %v635
    %v725 = vpop.f32.mrf.mxu0
    %v726 = vadd.f32 %v657, %v725
    %v727 = vpop.f32.mrf.mxu0
    %728 = vdwg.mxu0
    %729 = vst [vmem:[#allocation13] sm:$0xff] %v726
    %730 = vst [vmem:[#allocation14] sm:$0xff] %v635
    // Predicated region
    $region66: #{tpu_custom_call.1} parent=1 // pred_check
      _
    $region67: #{tpu_custom_call.1} parent=1 // pred_check_branch
      %732 = sbr.rel (0) target = $region69
    $region68: #{tpu_custom_call.1} parent=1 // pred_region
      %s734 = ssub.s32 128, 128
      %735 = vsyncadd [#allocation4], %s734
      %s737 = sshll.u32 [#allocation13], 4
      %s738 = int_to_ptr.vmem [resolvable:$true] %s737
      %740 = dma.vmem_to_hbm [thread:$0]  %s738, 128, %s10, [#allocation4]
    $region69: #{tpu_custom_call.1} parent=1 // pred_fallthru
      _
    // Predicated region
    $region70: #{tpu_custom_call.1} parent=1 // pred_check
      _
    $region71: #{tpu_custom_call.1} parent=1 // pred_check_branch
      %742 = sbr.rel (0) target = $region73
    $region72: #{tpu_custom_call.1} parent=1 // pred_region
      %s744 = ssub.s32 128, 128
      %745 = vsyncadd [#allocation15], %s744
      %s747 = sshll.u32 [#allocation14], 4
      %s748 = int_to_ptr.vmem [resolvable:$true] %s747
      %750 = dma.vmem_to_hbm [thread:$0]  %s748, 128, %s11, [#allocation15]
    $region73: #{tpu_custom_call.1} parent=1 // pred_fallthru
      _
    // Predicated region
    $region74: #{tpu_custom_call.1} parent=1 // pred_check
      _
    $region75: #{tpu_custom_call.1} parent=1 // pred_check_branch
      %752 = sbr.rel (0) target = $region77
    $region76: #{tpu_custom_call.1} parent=1 // pred_region
      %753 = dma.done [#allocation4], 128
    $region77: #{tpu_custom_call.1} parent=1 // pred_fallthru
      _
    // Predicated region
    $region78: #{tpu_custom_call.1} parent=1 // pred_check
      _
    $region79: #{tpu_custom_call.1} parent=1 // pred_check_branch
      %755 = sbr.rel (0) target = $region81
    $region80: #{tpu_custom_call.1} parent=1 // pred_region
      %756 = dma.done [#allocation15], 128
    $region81: #{tpu_custom_call.1} parent=1 // pred_fallthru
      _
    %757 = vsyncpa [#allocation3], 1
    %758 = vsyncpa [#allocation6], 1
    %759 = vsyncpa [#allocation9], 1
    %760 = vsyncpa [#allocation12], 1
    %761 = vsyncpa [#allocation4], 1
    %762 = vsyncpa [#allocation15], 1

</llo_original>
